<compile_context>
chip_gen: v7x
topology: tpu7x:2x2x1
jax: 0.10.0
libtpu: 0.0.40
codegen_flags: <defaults>
</compile_context>

<pallas_src>
import functools

import jax
import jax.numpy as jnp
from jax.experimental import pallas as pl
from jax.experimental.pallas import tpu as pltpu

_SMOOTH = 1e-10


def _round_up(x, m):
    return ((x + m - 1) // m) * m


def _dice_kernel(logits_ref, target_ref, w_ref, out_ref,
                 inter_acc, denom_acc, *, hw, tile_hw):
    j = pl.program_id(1)  # spatial tile index (reduction axis)

    @pl.when(j == 0)
    def _():
        inter_acc[...] = jnp.zeros_like(inter_acc)
        denom_acc[...] = jnp.zeros_like(denom_acc)

    x = logits_ref[0].astype(jnp.float32)   # (C, T): class on sublanes, spatial on lanes
    tgt = target_ref[0]                     # (1, T): int32 labels

    # Validity mask for the padded spatial tail (tile is a multiple of 128).
    pos = jax.lax.broadcasted_iota(jnp.int32, tgt.shape, 1) + j * tile_hw
    valid = pos < hw                        # (1, T)

    # Per-pixel softmax over the class (sublane) axis.  One reciprocal of the
    # (1, T) denominator + broadcast multiply instead of a (C, T) divide.
    m = jnp.max(x, axis=0, keepdims=True)                     # (1, T)
    e = jnp.exp(x - m)                                        # (C, T)
    inv = pl.reciprocal(jnp.sum(e, axis=0, keepdims=True))    # (1, T), exact
    p = e * inv                                               # (C, T)

    # One-hot(target) without dynamic gather; padded pixels masked out.
    cls = jax.lax.broadcasted_iota(jnp.int32, x.shape, 0)     # (C, T)
    is_t = jnp.logical_and(cls == tgt, valid)                 # (C, T)
    onehot = is_t.astype(jnp.float32)
    p = jnp.where(valid, p, 0.0)

    # Per-class partial sums over this spatial tile (one lane-reduce each).
    inter_acc[...] += jnp.sum(jnp.where(is_t, p, 0.0), axis=-1, keepdims=True)  # (C, 1)
    denom_acc[...] += jnp.sum(p + onehot, axis=-1, keepdims=True)               # (C, 1)

    @pl.when(j == pl.num_programs(1) - 1)
    def _():
        # dice_c = 1 - 2*|P ∩ G| / (|P| + |G| + smooth); weighted sum over classes.
        per_cls = 1.0 - 2.0 * inter_acc[...] / (denom_acc[...] + _SMOOTH)  # (C, 1)
        loss_n = jnp.sum(w_ref[...] * per_cls, axis=0, keepdims=True)      # (1, 1)
        out_ref[...] = loss_n.reshape(out_ref.shape)


def multiclass_dice_loss(logits_nchw, target_nhw, weights=None, *, tile_hw=8192):
    """Forward pass of MultiClassDiceLoss: softmax over dim=1, per-class Dice,
    class weights defaulting to [0, 1/(C-1), ..., 1/(C-1)], sum over classes,
    mean over the batch."""
    n, c, h, w = logits_nchw.shape
    hw = h * w

    # NCHW already has the spatial axis contiguous -> (N, C, HW) reshape is free.
    logits3 = logits_nchw.reshape(n, c, hw)
    target3 = target_nhw.reshape(n, 1, hw).astype(jnp.int32)

    if weights is None:
        wvec = jnp.full((c,), 1.0 / (c - 1), dtype=jnp.float32).at[0].set(0.0)
    else:
        wvec = jnp.asarray(weights, dtype=jnp.float32).reshape(c)
    wcol = wvec.reshape(c, 1)

    # Size the logits block to ~4 MiB in the *input* dtype (x2 double buffering
    # ~8 MiB + targets) so it fits v5e's 16 MiB default scoped VMEM with headroom.
    itemsize = jnp.dtype(logits3.dtype).itemsize
    budget_cols = max(128, ((4 * 1024 * 1024) // (c * itemsize)) // 128 * 128)
    tile = min(tile_hw, budget_cols, _round_up(hw, 128))
    tile = _round_up(tile, 128)
    grid_hw = pl.cdiv(hw, tile)

    # Pad the spatial axis to a multiple of the tile only when ragged; padded
    # pixels are masked out inside the kernel via the position mask.
    hw_pad = grid_hw * tile
    if hw_pad != hw:
        logits3 = jnp.pad(logits3, ((0, 0), (0, 0), (0, hw_pad - hw)))
        target3 = jnp.pad(target3, ((0, 0), (0, 0), (0, hw_pad - hw)))

    kernel = functools.partial(_dice_kernel, hw=hw, tile_hw=tile)

    per_batch = pl.pallas_call(
        kernel,
        out_shape=jax.ShapeDtypeStruct((n, 1, 1), jnp.float32),
        grid_spec=pltpu.PrefetchScalarGridSpec(
            num_scalar_prefetch=0,
            grid=(n, grid_hw),
            in_specs=[
                pl.BlockSpec((1, c, tile), lambda b, j: (b, 0, j)),   # logits (C on sublanes)
                pl.BlockSpec((1, 1, tile), lambda b, j: (b, 0, j)),   # targets (lane-dense)
                pl.BlockSpec((c, 1), lambda b, j: (0, 0)),            # class weights (resident)
            ],
            out_specs=pl.BlockSpec((1, 1, 1), lambda b, j: (b, 0, 0)),
            scratch_shapes=[
                pltpu.VMEM((c, 1), jnp.float32),   # intersection accumulator
                pltpu.VMEM((c, 1), jnp.float32),   # |P| + |G| accumulator
            ],
        ),
        compiler_params=pltpu.CompilerParams(
            dimension_semantics=("parallel", "arbitrary"),
        ),
    )(logits3, target3, wcol)

    # Trivial O(N) finish: sum of per-batch weighted Dice losses, divided by N.
    return jnp.sum(per_batch) / jnp.float32(n)


if __name__ == "__main__":
    key = jax.random.PRNGKey(0)
    k1, k2 = jax.random.split(key)

    N, C, H, W = 2, 4, 16, 16
    logits = jax.random.normal(k1, (N, C, H, W), dtype=jnp.float32)
    target = jax.random.randint(k2, (N, H, W), 0, C, dtype=jnp.int32)

    loss = multiclass_dice_loss(logits, target)
    jax.block_until_ready(loss)

    # Pure-JAX reference (same math as the PyTorch MultiClassDiceLoss.forward).
    probs = jax.nn.softmax(logits, axis=1)
    onehot = jax.nn.one_hot(target, C, axis=1, dtype=jnp.float32)
    pf = probs.reshape(N, C, -1)
    of = onehot.reshape(N, C, -1)
    inter = jnp.sum(pf * of, axis=-1)
    dice = 1.0 - 2.0 * inter / (jnp.sum(pf, axis=-1) + jnp.sum(of, axis=-1) + _SMOOTH)
    wts = jnp.full((1, C), 1.0 / (C - 1), dtype=jnp.float32).at[0, 0].set(0.0)
    ref = jnp.sum(dice * wts) / N

    assert jnp.allclose(loss, ref, atol=1e-5, rtol=1e-5), (loss, ref)
    print("KERNEL_OK")
</pallas_src>

<mosaic_0001>
module attributes {stable_mosaic.version = 11 : i64} {
  func.func @_dice_kernel(%arg0: i32, %arg1: i32, %arg2: memref<1x4x256xf32, #tpu.memory_space<vmem>>, %arg3: memref<1x1x256xi32, #tpu.memory_space<vmem>>, %arg4: memref<4x1xf32, #tpu.memory_space<vmem>>, %arg5: memref<1x1x1xf32, #tpu.memory_space<vmem>>, %arg6: memref<4x1xf32, #tpu.memory_space<vmem>>, %arg7: memref<4x1xf32, #tpu.memory_space<vmem>>) attributes {dimension_semantics = [#tpu.dimension_semantics<parallel>, #tpu.dimension_semantics<arbitrary>], iteration_bounds = array<i64: 2, 1>, scalar_prefetch = 0 : i64, scratch_operands = 2 : i64, tpu.core_type = #tpu.core_type<tc>, window_params = [{transform_indices = @transform_0, window_bounds = array<i64: 1, 4, 256>}, {transform_indices = @transform_1, window_bounds = array<i64: 1, 1, 256>}, {pipeline_mode = #tpu.pipeline_mode<synchronous>, transform_indices = @transform_2, window_bounds = array<i64: 4, 1>}, {transform_indices = @transform_3, window_bounds = array<i64: 1, 1, 1>}]} {
    %c0_i32 = arith.constant 0 : i32
    %0 = arith.cmpi eq, %arg1, %c0_i32 : i32
    %1 = arith.extui %0 : i1 to i32
    %c0_i32_0 = arith.constant 0 : i32
    %2 = arith.cmpi ne, %1, %c0_i32_0 : i32
    scf.if %2 {
      %cst_22 = arith.constant 0.000000e+00 : f32
      %50 = vector.broadcast %cst_22 : f32 to vector<4x1xf32>
      %c0_23 = arith.constant 0 : index
      %c0_24 = arith.constant 0 : index
      %51 = vector.load %arg6[%c0_23, %c0_24] : memref<4x1xf32, #tpu.memory_space<vmem>>, vector<4x1xf32>
      tpu.vector_store %arg6[%c0_23, %c0_24], %50 {strides = array<i32>} : memref<4x1xf32, #tpu.memory_space<vmem>>, vector<4x1xf32>,
      %cst_25 = arith.constant 0.000000e+00 : f32
      %52 = vector.broadcast %cst_25 : f32 to vector<4x1xf32>
      %c0_26 = arith.constant 0 : index
      %c0_27 = arith.constant 0 : index
      %53 = vector.load %arg7[%c0_26, %c0_27] : memref<4x1xf32, #tpu.memory_space<vmem>>, vector<4x1xf32>
      tpu.vector_store %arg7[%c0_26, %c0_27], %52 {strides = array<i32>} : memref<4x1xf32, #tpu.memory_space<vmem>>, vector<4x1xf32>,
    } else {
    }
    %c0 = arith.constant 0 : index
    %c0_1 = arith.constant 0 : index
    %c0_2 = arith.constant 0 : index
    %3 = vector.load %arg2[%c0, %c0_1, %c0_2] : memref<1x4x256xf32, #tpu.memory_space<vmem>>, vector<1x4x256xf32>
    %4 = vector.shape_cast %3 : vector<1x4x256xf32> to vector<4x256xf32>
    %c0_3 = arith.constant 0 : index
    %c0_4 = arith.constant 0 : index
    %c0_5 = arith.constant 0 : index
    %5 = vector.load %arg3[%c0_3, %c0_4, %c0_5] : memref<1x1x256xi32, #tpu.memory_space<vmem>>, vector<1x1x256xi32>
    %6 = vector.shape_cast %5 : vector<1x1x256xi32> to vector<1x256xi32>
    %7 = tpu.iota {dimensions = array<i32: 1>} : vector<1x256xi32>
    %c256_i32 = arith.constant 256 : i32
    %8 = arith.muli %arg1, %c256_i32 : i32
    %9 = vector.broadcast %8 : i32 to vector<1x256xi32>
    %10 = arith.addi %7, %9 : vector<1x256xi32>
    %c256_i32_6 = arith.constant 256 : i32
    %11 = vector.broadcast %c256_i32_6 : i32 to vector<1x256xi32>
    %12 = arith.cmpi slt, %10, %11 : vector<1x256xi32>
    %cst = arith.constant dense<0xFF800000> : vector<256xf32>
    %13 = vector.multi_reduction <maximumf>, %4, %cst [0] : vector<4x256xf32> to vector<256xf32>
    %14 = vector.shape_cast %13 : vector<256xf32> to vector<1x256xf32>
    %15 = vector.broadcast %14 : vector<1x256xf32> to vector<4x256xf32>
    %16 = arith.subf %4, %15 : vector<4x256xf32>
    %17 = math.exp %16 : vector<4x256xf32>
    %cst_7 = arith.constant dense<0.000000e+00> : vector<256xf32>
    %18 = vector.multi_reduction <add>, %17, %cst_7 [0] : vector<4x256xf32> to vector<256xf32>
    %19 = vector.shape_cast %18 : vector<256xf32> to vector<1x256xf32>
    %20 = tpu.reciprocal %19 : vector<1x256xf32> -> vector<1x256xf32>
    %21 = vector.broadcast %20 : vector<1x256xf32> to vector<4x256xf32>
    %22 = arith.mulf %17, %21 : vector<4x256xf32>
    %23 = tpu.iota {dimensions = array<i32: 0>} : vector<4x256xi32>
    %24 = vector.broadcast %6 : vector<1x256xi32> to vector<4x256xi32>
    %25 = arith.cmpi eq, %23, %24 : vector<4x256xi32>
    %26 = vector.broadcast %12 : vector<1x256xi1> to vector<4x256xi1>
    %27 = arith.andi %25, %26 : vector<4x256xi1>
    %28 = arith.extui %27 : vector<4x256xi1> to vector<4x256xi32>
    %29 = arith.sitofp %28 : vector<4x256xi32> to vector<4x256xf32>
    %cst_8 = arith.constant 0.000000e+00 : f32
    %30 = vector.shape_cast %12 : vector<1x256xi1> to vector<1x256xi1>
    %31 = vector.broadcast %30 : vector<1x256xi1> to vector<4x256xi1>
    %32 = vector.broadcast %cst_8 : f32 to vector<4x256xf32>
    %33 = arith.select %31, %22, %32 : vector<4x256xi1>, vector<4x256xf32>
    %c0_9 = arith.constant 0 : index
    %c0_10 = arith.constant 0 : index
    %34 = vector.load %arg6[%c0_9, %c0_10] : memref<4x1xf32, #tpu.memory_space<vmem>>, vector<4x1xf32>
    %cst_11 = arith.constant 0.000000e+00 : f32
    %35 = vector.broadcast %cst_11 : f32 to vector<4x256xf32>
    %36 = arith.select %27, %33, %35 : vector<4x256xi1>, vector<4x256xf32>
    %cst_12 = arith.constant dense<0.000000e+00> : vector<4xf32>
    %37 = vector.multi_reduction <add>, %36, %cst_12 [1] : vector<4x256xf32> to vector<4xf32>
    %38 = vector.shape_cast %37 : vector<4xf32> to vector<4x1xf32>
    %39 = arith.addf %34, %38 : vector<4x1xf32>
    %c0_13 = arith.constant 0 : index
    %c0_14 = arith.constant 0 : index
    %40 = vector.load %arg6[%c0_13, %c0_14] : memref<4x1xf32, #tpu.memory_space<vmem>>, vector<4x1xf32>
    tpu.vector_store %arg6[%c0_13, %c0_14], %39 {strides = array<i32>} : memref<4x1xf32, #tpu.memory_space<vmem>>, vector<4x1xf32>,
    %c0_15 = arith.constant 0 : index
    %c0_16 = arith.constant 0 : index
    %41 = vector.load %arg7[%c0_15, %c0_16] : memref<4x1xf32, #tpu.memory_space<vmem>>, vector<4x1xf32>
    %42 = arith.addf %33, %29 : vector<4x256xf32>
    %cst_17 = arith.constant dense<0.000000e+00> : vector<4xf32>
    %43 = vector.multi_reduction <add>, %42, %cst_17 [1] : vector<4x256xf32> to vector<4xf32>
    %44 = vector.shape_cast %43 : vector<4xf32> to vector<4x1xf32>
    %45 = arith.addf %41, %44 : vector<4x1xf32>
    %c0_18 = arith.constant 0 : index
    %c0_19 = arith.constant 0 : index
    %46 = vector.load %arg7[%c0_18, %c0_19] : memref<4x1xf32, #tpu.memory_space<vmem>>, vector<4x1xf32>
    tpu.vector_store %arg7[%c0_18, %c0_19], %45 {strides = array<i32>} : memref<4x1xf32, #tpu.memory_space<vmem>>, vector<4x1xf32>,
    %c0_i32_20 = arith.constant 0 : i32
    %47 = arith.cmpi eq, %arg1, %c0_i32_20 : i32
    %48 = arith.extui %47 : i1 to i32
    %c0_i32_21 = arith.constant 0 : i32
    %49 = arith.cmpi ne, %48, %c0_i32_21 : i32
    scf.if %49 {
      %c0_22 = arith.constant 0 : index
      %c0_23 = arith.constant 0 : index
      %50 = vector.load %arg6[%c0_22, %c0_23] : memref<4x1xf32, #tpu.memory_space<vmem>>, vector<4x1xf32>
      %cst_24 = arith.constant 2.000000e+00 : f32
      %51 = vector.broadcast %cst_24 : f32 to vector<4x1xf32>
      %52 = arith.mulf %51, %50 : vector<4x1xf32>
      %c0_25 = arith.constant 0 : index
      %c0_26 = arith.constant 0 : index
      %53 = vector.load %arg7[%c0_25, %c0_26] : memref<4x1xf32, #tpu.memory_space<vmem>>, vector<4x1xf32>
      %cst_27 = arith.constant 1.000000e-10 : f32
      %54 = vector.broadcast %cst_27 : f32 to vector<4x1xf32>
      %55 = arith.addf %53, %54 : vector<4x1xf32>
      %56 = arith.divf %52, %55 : vector<4x1xf32>
      %cst_28 = arith.constant 1.000000e+00 : f32
      %57 = vector.broadcast %cst_28 : f32 to vector<4x1xf32>
      %58 = arith.subf %57, %56 : vector<4x1xf32>
      %c0_29 = arith.constant 0 : index
      %c0_30 = arith.constant 0 : index
      %59 = vector.load %arg4[%c0_29, %c0_30] : memref<4x1xf32, #tpu.memory_space<vmem>>, vector<4x1xf32>
      %60 = arith.mulf %59, %58 : vector<4x1xf32>
      %cst_31 = arith.constant dense<0.000000e+00> : vector<1xf32>
      %61 = vector.multi_reduction <add>, %60, %cst_31 [0] : vector<4x1xf32> to vector<1xf32>
      %62 = vector.shape_cast %61 : vector<1xf32> to vector<1x1xf32>
      %63 = vector.shape_cast %62 : vector<1x1xf32> to vector<1x1x1xf32>
      %c0_32 = arith.constant 0 : index
      %c0_33 = arith.constant 0 : index
      %c0_34 = arith.constant 0 : index
      %64 = vector.load %arg5[%c0_32, %c0_33, %c0_34] : memref<1x1x1xf32, #tpu.memory_space<vmem>>, vector<1x1x1xf32>
      tpu.vector_store %arg5[%c0_32, %c0_33, %c0_34], %63 {strides = array<i32>} : memref<1x1x1xf32, #tpu.memory_space<vmem>>, vector<1x1x1xf32>,
    } else {
    }
    return
  }
  func.func @transform_0(%arg0: i32, %arg1: i32) -> (i32, i32, i32) {
    %c0_i32 = arith.constant 0 : i32
    %c0_i32_0 = arith.constant 0 : i32
    return %arg0, %c0_i32, %arg1 : i32, i32, i32
  }
  func.func @transform_1(%arg0: i32, %arg1: i32) -> (i32, i32, i32) {
    %c0_i32 = arith.constant 0 : i32
    %c0_i32_0 = arith.constant 0 : i32
    return %arg0, %c0_i32, %arg1 : i32, i32, i32
  }
  func.func @transform_2(%arg0: i32, %arg1: i32) -> (i32, i32) {
    %c0_i32 = arith.constant 0 : i32
    %c0_i32_0 = arith.constant 0 : i32
    %c0_i32_1 = arith.constant 0 : i32
    return %c0_i32, %c0_i32_0 : i32, i32
  }
  func.func @transform_3(%arg0: i32, %arg1: i32) -> (i32, i32, i32) {
    %c0_i32 = arith.constant 0 : i32
    %c0_i32_0 = arith.constant 0 : i32
    %c0_i32_1 = arith.constant 0 : i32
    return %arg0, %c0_i32, %c0_i32_0 : i32, i32, i32
  }
}

</mosaic_0001>

<llo_original>
// kernel: tpu_custom_call.1
$region0: #{tpu_custom_call.1}
  #allocation0 [shape = 'u32[]', space=smem, size = 0x4, offset = 0x4, fixed_abs, tag = 'smem constant byte address 0x4 - core index']
  #allocation1 [shape = 'u32[144,128]{1,0:T(1,128)}', space=vmem, size = 0x12000, scoped, tag = 'internal scratch']
  #allocation2 [shape = 'f32[4,1]{1,0:T(4,128)}', space=vmem, size = 0x800, scoped, tag = 'scratch operand']
  #allocation3 [shape = 'f32[4,1]{1,0:T(4,128)}', space=vmem, size = 0x800, scoped, tag = 'scratch operand']
  %s0 = inlined_call_operand.hbm [shape: f32[2,4,256], index: 0, kind: input, shape index: {}]
  %s1 = inlined_call_operand.vmem [shape: s32[2,1,256], index: 1, kind: input, shape index: {}]
  %s2 = inlined_call_operand.vmem [shape: f32[4,1], index: 2, kind: input, shape index: {}]
  %s3 = inlined_call_operand.vmem [shape: f32[2,1,1], index: 3, kind: output, shape index: {}]
  %s4 = sld [smem:[#allocation0]]
  $region57: #{tpu_custom_call.1} parent=0
    _
  %s6 = ssub.s32 1, %s4
  %s7 = scalar_select 0, %s6, %s4
  $region1: #{tpu_custom_call.1} parent=0
    #allocation4 [shape = 'u8[8192]{0}', space=vmem, size = 0x2000, scoped, tag = 'input window, operand 0']
    #allocation5 [shape = 's32[2]{0}', space=sflag, size = 0x8, scoped, tag = 'scoped memory for tpu_custom_call.1']
    %8 = vsyncpa [#allocation5], 0
    %s9 = scalar_lea.sflag [#allocation5], 1
    %10 = vsyncpa %s9, 0
    loop: start=0, step=1, limit=4
    $region2: #{tpu_custom_call.1} parent=1 // loop_pre_header
      _
    $region3: #{tpu_custom_call.1} parent=1 // loop_header
      %s12 = sphi 0, %s16
      %p13 = scmp.ge.s32.totalorder %s12, 4
      %s19 = sphi 0, %s31
      %s20 = sphi 0, %s27
      %s21 = sphi 0, %s19
      %s22 = sphi 0, %s20
      %s23 = sphi 0, %s21
      %s24 = sphi 0, %s22
      %s36 = sphi 0, %s38
      %s39 = sphi 0, %s36
      %s40 = sphi 0, %s39
      %s56 = sphi 0, %s40
      %s64 = sphi 0, %s66
      %s67 = sphi 0, %s64
      %s68 = sphi 0, %s67
      %s84 = sphi 0, %s68
      %s88 = sphi 0, %s88
      %s90 = sphi 0, %s88
      %s91 = sphi 0, %s90
      %s105 = sphi 0, %s91
      %s111 = sphi 0, %s113
      %s114 = sphi 0, %s111
      %s115 = sphi 0, %s114
      %s131 = sphi 0, %s115
    $region4: #{tpu_custom_call.1} parent=1 // loop_header_branch
      %15 = sbr.rel (%p13) target = $region8
    $region5: #{tpu_custom_call.1} parent=1 // loop_body
      %s17 = ssub.s32 %s12, 1
      %s18 = ssub.s32 %s12, 2
      %s25 = sadd.s32 1, %s20
      %p26 = scmp.ge.s32.totalorder %s25, 1
      %s27 = scalar_select %p26, 0, %s25
      %s28 = sadd.s32 1, %s19
      %s29 = scalar_select %p26, %s28, %s19
      %p30 = scmp.ge.s32.totalorder %s29, 2
      %s31 = scalar_select %p30, 0, %s29
      %s32 = ssub.s32 %s19, %s31
      %s33 = ssub.s32 %s20, %s27
      %s34 = sor.u32 %s32, %s33
      %p35 = scmp.eq.s32.totalorder %s34, 0
      %s37 = sadd.s32 %s36, 1
      %s38 = scalar_select %p35, %s36, %s37
      %p41 = pneg %p35
      %p42 = scmp.eq.s32.totalorder %s12, 1
      %p43 = por %p41, %p42
      %p44 = scmp.ne.s32.totalorder %s36, %s39
      %p45 = scmp.eq.s32.totalorder %s12, 0
      %p46 = por %p44, %p45
      %p47 = scmp.ne.s32.totalorder %s36, %s39
      %p48 = scmp.eq.s32.totalorder %s17, 1
      %p49 = por %p47, %p48
      %p50 = scmp.ne.s32.totalorder %s39, %s40
      %p51 = scmp.eq.s32.totalorder %s17, 0
      %p52 = por %p50, %p51
      %p53 = scmp.ne.s32.totalorder %s39, %s40
      %p54 = scmp.eq.s32.totalorder %s18, 1
      %p55 = por %p53, %p54
      %p57 = scmp.ne.s32.totalorder %s40, %s56
      %p58 = scmp.eq.s32.totalorder %s18, 0
      %p59 = por %p57, %p58
      %s60 = ssub.s32 %s19, %s31
      %s61 = ssub.s32 %s20, %s27
      %s62 = sor.u32 %s60, %s61
      %p63 = scmp.eq.s32.totalorder %s62, 0
      %s65 = sadd.s32 %s64, 1
      %s66 = scalar_select %p63, %s64, %s65
      %p69 = pneg %p63
      %p70 = scmp.eq.s32.totalorder %s12, 1
      %p71 = por %p69, %p70
      %p72 = scmp.ne.s32.totalorder %s64, %s67
      %p73 = scmp.eq.s32.totalorder %s12, 0
      %p74 = por %p72, %p73
      %p75 = scmp.ne.s32.totalorder %s64, %s67
      %p76 = scmp.eq.s32.totalorder %s17, 1
      %p77 = por %p75, %p76
      %p78 = scmp.ne.s32.totalorder %s67, %s68
      %p79 = scmp.eq.s32.totalorder %s17, 0
      %p80 = por %p78, %p79
      %p81 = scmp.ne.s32.totalorder %s67, %s68
      %p82 = scmp.eq.s32.totalorder %s18, 1
      %p83 = por %p81, %p82
      %p85 = scmp.ne.s32.totalorder %s68, %s84
      %p86 = scmp.eq.s32.totalorder %s18, 0
      %p87 = por %p85, %p86
      %s89 = sadd.s32 %s88, 1
      %p92 = scmp.eq.s32.totalorder %s12, 1
      %p93 = scmp.ne.s32.totalorder %s88, %s90
      %p94 = scmp.eq.s32.totalorder %s12, 0
      %p95 = por %p93, %p94
      %p96 = scmp.ne.s32.totalorder %s88, %s90
      %p97 = scmp.eq.s32.totalorder %s17, 1
      %p98 = por %p96, %p97
      %p99 = scmp.ne.s32.totalorder %s90, %s91
      %p100 = scmp.eq.s32.totalorder %s17, 0
      %p101 = por %p99, %p100
      %p102 = scmp.ne.s32.totalorder %s90, %s91
      %p103 = scmp.eq.s32.totalorder %s18, 1
      %p104 = por %p102, %p103
      %p106 = scmp.ne.s32.totalorder %s91, %s105
      %p107 = scmp.eq.s32.totalorder %s18, 0
      %p108 = por %p106, %p107
      %s109 = ssub.s32 %s19, %s31
      %p110 = scmp.eq.s32.totalorder %s109, 0
      %s112 = sadd.s32 %s111, 1
      %s113 = scalar_select %p110, %s111, %s112
      %p116 = pneg %p110
      %p117 = scmp.eq.s32.totalorder %s12, 1
      %p118 = por %p116, %p117
      %p119 = scmp.ne.s32.totalorder %s111, %s114
      %p120 = scmp.eq.s32.totalorder %s12, 0
      %p121 = por %p119, %p120
      %p122 = scmp.ne.s32.totalorder %s111, %s114
      %p123 = scmp.eq.s32.totalorder %s17, 1
      %p124 = por %p122, %p123
      %p125 = scmp.ne.s32.totalorder %s114, %s115
      %p126 = scmp.eq.s32.totalorder %s17, 0
      %p127 = por %p125, %p126
      %p128 = scmp.ne.s32.totalorder %s114, %s115
      %p129 = scmp.eq.s32.totalorder %s18, 1
      %p130 = por %p128, %p129
      %p132 = scmp.ne.s32.totalorder %s115, %s131
      %p133 = scmp.eq.s32.totalorder %s18, 0
      %p134 = por %p132, %p133
      %p135 = scmp.le.s32.totalorder 1, %s12
      %p136 = scmp.lt.s32.totalorder %s12, 3
      %p137 = pnand %p135, %p136
      %p138 = pneg %p137
      // Predicated region
      $region9: #{tpu_custom_call.1} parent=5 // pred_check
        _
      $region10: #{tpu_custom_call.1} parent=5 // pred_check_branch
        %140 = sbr.rel (%p137) target = $region12
      $region11: #{tpu_custom_call.1} parent=5 // pred_region
        %s141 = ssub.s32 %s12, 1
        // Predicated region
        $region13: #{tpu_custom_call.1} parent=11 // pred_check
          %p142 = pneg %p101
        $region14: #{tpu_custom_call.1} parent=11 // pred_check_branch
          %144 = sbr.rel (%p142) target = $region16
        $region15: #{tpu_custom_call.1} parent=11 // pred_region
          _
        $region16: #{tpu_custom_call.1} parent=11 // pred_fallthru
          _
      $region12: #{tpu_custom_call.1} parent=5 // pred_fallthru
        _
      %p145 = scmp.lt.s32.totalorder %s12, 2
      // Predicated region
      $region17: #{tpu_custom_call.1} parent=5 // pred_check
        %p146 = pneg %p145
      $region18: #{tpu_custom_call.1} parent=5 // pred_check_branch
        %148 = sbr.rel (%p146) target = $region20
      $region19: #{tpu_custom_call.1} parent=5 // pred_region
        // Predicated region
        $region21: #{tpu_custom_call.1} parent=19 // pred_check
          %p149 = pneg %p46
        $region22: #{tpu_custom_call.1} parent=19 // pred_check_branch
          %151 = sbr.rel (%p149) target = $region24
        $region23: #{tpu_custom_call.1} parent=19 // pred_region
          %s152 = sand.u32 %s36, 1
          %s153 = scalar_lea.sflag [#allocation5], %s152
          %s154 = sand.u32 %s36, 1
          %s155 = smul.addr %s154, 8
          %s156 = scalar_lea.vmem [#allocation4], %s155
          %s157 = smul.u32 2, %s20
          %s159 = ssub.s32 128, 128
          %160 = vsyncadd %s153, %s159
          %s161 = smul.addr %s19, 2
          %s162 = sadd.s32 %s157, %s161
          %s163 = smul.addr %s162, 64
          %s164 = scalar_lea.hbm %s0, %s163
          %s166 = sshll.u32 %s156, 4
          %s167 = int_to_ptr.vmem [resolvable:$true] %s166
          %169 = dma.hbm_to_vmem [thread:$0]  %s164, 128, %s167, %s153
        $region24: #{tpu_custom_call.1} parent=19 // pred_fallthru
          _
        // Predicated region
        $region25: #{tpu_custom_call.1} parent=19 // pred_check
          %p170 = pneg %p74
        $region26: #{tpu_custom_call.1} parent=19 // pred_check_branch
          %172 = sbr.rel (%p170) target = $region28
        $region27: #{tpu_custom_call.1} parent=19 // pred_region
          %s173 = smul.u32 2, %s20
          %p174 = scmp.lt.s32.totalorder %s19, 1
          %s175 = scalar_select %p174, %s19, 1
          %p176 = scmp.lt.s32.totalorder %s173, 1
          %s177 = scalar_select %p176, %s173, 1
          %s178 = smul.addr %s175, 2
          %s179 = sadd.s32 %s177, %s178
          %s180 = scalar_lea.vmem %s1, %s179
          %s181 = smul.u32 2, %s20
        $region28: #{tpu_custom_call.1} parent=19 // pred_fallthru
          _
      $region20: #{tpu_custom_call.1} parent=5 // pred_fallthru
        _
      %p182 = scmp.le.s32.totalorder 1, %s12
      %p183 = scmp.lt.s32.totalorder %s12, 3
      %p184 = pnand %p182, %p183
      %p185 = pneg %p184
      // Predicated region
      $region29: #{tpu_custom_call.1} parent=5 // pred_check
        _
      $region30: #{tpu_custom_call.1} parent=5 // pred_check_branch
        %187 = sbr.rel (%p184) target = $region32
      $region31: #{tpu_custom_call.1} parent=5 // pred_region
        %s188 = ssub.s32 %s12, 1
        %s189 = sand.u32 %s39, 1
        %s190 = scalar_lea.sflag [#allocation5], %s189
        %s191 = sand.u32 %s39, 1
        %s192 = smul.addr %s191, 8
        %s193 = scalar_lea.vmem [#allocation4], %s192
        // Predicated region
        $region33: #{tpu_custom_call.1} parent=31 // pred_check
          %p194 = pneg %p52
        $region34: #{tpu_custom_call.1} parent=31 // pred_check_branch
          %196 = sbr.rel (%p194) target = $region36
        $region35: #{tpu_custom_call.1} parent=31 // pred_region
          %197 = dma.done %s190, 128
        $region36: #{tpu_custom_call.1} parent=31 // pred_fallthru
          _
        %s198 = sand.u32 %s39, 1
        %s199 = scalar_lea.sflag [#allocation5], %s198
        %s200 = sand.u32 %s39, 1
        %s201 = smul.addr %s200, 8
        %s202 = scalar_lea.vmem [#allocation4], %s201
        %p203 = pneg %p52
        %p204 = pneg %p49
        %s205 = smul.u32 2, %s22
        %p206 = scmp.lt.s32.totalorder %s21, 1
        %s207 = scalar_select %p206, %s21, 1
        %p208 = scmp.lt.s32.totalorder %s205, 1
        %s209 = scalar_select %p208, %s205, 1
        %s210 = smul.addr %s207, 2
        %s211 = sadd.s32 %s209, %s210
        %s212 = scalar_lea.vmem %s1, %s211
        %p213 = pneg %p80
        %p214 = pneg %p77
        %p215 = pneg %p101
        %p216 = pneg %p98
        %p217 = pneg %p127
        %p218 = pneg %p124
        %p219 = scmp.lt.s32.totalorder %s21, 1
        %s220 = scalar_select %p219, %s21, 1
        %s221 = scalar_lea.vmem %s3, %s220
        %s222 = smul.u32 2, %s22
        %s223 = smul.u32 2, %s22
        %p224 = scmp.lt.s32.totalorder %s21, 1
        %s225 = scalar_select %p224, %s21, 1
        %p226 = scmp.lt.s32.totalorder %s223, 1
        %s227 = scalar_select %p226, %s223, 1
        %s228 = smul.addr %s225, 2
        %s229 = sadd.s32 %s227, %s228
        %s230 = scalar_lea.vmem %s1, %s229
        %s231 = smul.u32 2, %s22
        %p232 = scmp.lt.s32.totalorder %s21, 1
        %s233 = scalar_select %p232, %s21, 1
        %s234 = scalar_lea.vmem %s3, %s233
        %p235 = scmp.eq.s32.totalorder %s22, 0
        // Predicated region
        $region37: #{tpu_custom_call.1} parent=31 // pred_check
          %p236 = pneg %p235
        $region38: #{tpu_custom_call.1} parent=31 // pred_check_branch
          %238 = sbr.rel (%p236) target = $region40
        $region39: #{tpu_custom_call.1} parent=31 // pred_region
          %vm239 = vcmask 3072
          %240 = vst.msk [vmem:[#allocation2] sm:$0xf] %vm239, 0.0
          %241 = vst.msk [vmem:[#allocation3] sm:$0xf] %vm239, 0.0
        $region40: #{tpu_custom_call.1} parent=31 // pred_fallthru
          _
        %v242 = vld [vmem:[%s193] sm:$0xff]
        %v243 = vld [vmem:[%s230] sm:$0x3]
        %v244 = vlaneseq
        %v245 = vand.u32 %v244, 127
        %v246 = vadd.s32 %v245, 128
        %s247 = smul.u32 %s22, 256
        %v248 = vstv %s247
        %v249 = vadd.s32 %v245, %v248
        %v250 = vadd.s32 %v246, %v248
        %vm251 = vcmp.lt.s32.totalorder %v249, 256
        %vm252 = vcmp.lt.s32.totalorder %v250, 256
        %v254 = vcombine.high %v242, %v242
        %vm256 = vcmask 1043456
        %v257 = vsel %vm256, %v242, -inf
        %v258 = vrot.slane %v257, 4
        %v259 = vmax.f32 %v257, %v258
        %v260 = vrot.slane %v259, 2
        %v261 = vmax.f32 %v259, %v260
        %v262 = vrot.slane %v261, 1
        %v263 = vmax.f32 %v261, %v262
        %v264 = vsel %vm256, %v254, -inf
        %v265 = vrot.slane %v264, 4
        %v266 = vmax.f32 %v264, %v265
        %v267 = vrot.slane %v266, 2
        %v268 = vmax.f32 %v266, %v267
        %v269 = vrot.slane %v268, 1
        %v270 = vmax.f32 %v268, %v269
        %v273 = vcombine.low %v263, %v270
        %v275 = vsub.f32 %v242, %v273
        %v276 = vmul.f32 %v275, 1.442695
        %v277 = vpow.pop %v276
        %v279 = vcombine.high %v277, %v277
        %v281 = vsel %vm256, %v277, 0.0
        %v282 = vrot.slane %v281, 4
        %v283 = vadd.f32 %v281, %v282
        %v284 = vrot.slane %v283, 2
        %v285 = vadd.f32 %v283, %v284
        %v286 = vrot.slane %v285, 1
        %v287 = vadd.f32 %v285, %v286
        %v288 = vsel %vm256, %v279, 0.0
        %v289 = vrot.slane %v288, 4
        %v290 = vadd.f32 %v288, %v289
        %v291 = vrot.slane %v290, 2
        %v292 = vadd.f32 %v290, %v291
        %v293 = vrot.slane %v292, 1
        %v294 = vadd.f32 %v292, %v293
        %v295 = vrcp.pop %v287
        %v296 = vrcp.pop %v294
        %v299 = vcombine.low %v295, %v296
        %v301 = vmul.f32 %v277, %v299
        %v302 = vlaneseq
        %v303 = vshrl.u32 %v302, 7
        %v304 = vlaneseq
        %v305 = vshrl.u32 %v304, 7
        %v306 = vsub.s32 0, %v305
        %v307 = vrot.slane %v243, %v306
        %v308 = vlaneseq
        %v309 = vshrl.u32 %v308, 7
        %v310 = vsub.s32 1, %v309
        %v311 = vrot.slane %v243, %v310
        %vm312 = vcmp.eq.s32.totalorder %v303, %v307
        %vm313 = vcmp.eq.s32.totalorder %v303, %v311
        %v314 = vsel %vm251, 1, 0
        %v315 = vsel %vm252, 1, 0
        %vm316 = vcmp.eq.s32.totalorder %v314, 1
        %vm317 = vcmp.eq.s32.totalorder %v315, 1
        %vm318 = vmand %vm312, %vm316
        %vm319 = vmand %vm313, %vm317
        %v320 = vsel %vm318, 1, 0
        %v321 = vsel %vm319, 1, 0
        %v322 = vcvt.s32.f32 %v320
        %v323 = vcvt.s32.f32 %v321
        %v325 = vcombine.high %v301, %v301
        %v327 = vsel %vm316, %v301, 0.0
        %v328 = vsel %vm317, %v325, 0.0
        %v329 = vld [vmem:[#allocation2] sm:$0xf]
        %v330 = vsel %vm318, %v327, 0.0
        %v331 = vsel %vm319, %v328, 0.0
        %v332 = vsel %vm256, %v330, 0.0
        %v333 = vsel %vm256, %v331, 0.0
        %v334 = vadd.f32 %v332, %v333
        %335 = vadd.xlane.f32.xlu0 %v334
        %v336 = vpop.xlane.xlu0 %335
        %v337 = vadd.f32 %v329, %v336
        %vm338 = vcmask 3072
        %339 = vst.msk [vmem:[#allocation2] sm:$0xf] %vm338, %v337
        %v340 = vld [vmem:[#allocation3] sm:$0xf]
        %v341 = vadd.f32 %v327, %v322
        %v342 = vadd.f32 %v328, %v323
        %v343 = vsel %vm256, %v341, 0.0
        %v344 = vsel %vm256, %v342, 0.0
        %v345 = vadd.f32 %v343, %v344
        %346 = vadd.xlane.f32.xlu0 %v345
        %v347 = vpop.xlane.xlu0 %346
        %v348 = vadd.f32 %v340, %v347
        %349 = vst.msk [vmem:[#allocation3] sm:$0xf] %vm338, %v348
        // Predicated region
        $region41: #{tpu_custom_call.1} parent=31 // pred_check
          %p350 = pneg %p235
        $region42: #{tpu_custom_call.1} parent=31 // pred_check_branch
          %352 = sbr.rel (%p350) target = $region44
        $region43: #{tpu_custom_call.1} parent=31 // pred_region
          %v353 = vld [vmem:[#allocation2] sm:$0xf]
          %v354 = vmul.f32 %v353, 2.0
          %v355 = vld [vmem:[#allocation3] sm:$0xf]
          %v356 = vadd.f32 %v355, 1e-10
          %v357 = vrcp.pop %v356
          %v358 = vmul.f32 %v354, %v357
          %v359 = vsub.f32 1.0, %v358
          %v360 = vld [vmem:[%s2] sm:$0xf]
          %v361 = vmul.f32 %v360, %v359
          %v362 = vsel %vm338, %v361, 0.0
          %v363 = vrot.slane %v362, 4
          %v364 = vadd.f32 %v362, %v363
          %v365 = vrot.slane %v364, 2
          %v366 = vadd.f32 %v364, %v365
          %v367 = vrot.slane %v366, 1
          %v368 = vadd.f32 %v366, %v367
          %vm369 = vcmask 0
          %370 = vst.msk [vmem:[%s234] sm:$0x1] %vm369, %v368
        $region44: #{tpu_custom_call.1} parent=31 // pred_fallthru
          _
        %p371 = scmp.lt.s32.totalorder %s21, 1
        %s372 = scalar_select %p371, %s21, 1
        %s373 = scalar_lea.vmem %s3, %s372
        // Predicated region
        $region45: #{tpu_custom_call.1} parent=31 // pred_check
          %p374 = pneg %p124
        $region46: #{tpu_custom_call.1} parent=31 // pred_check_branch
          %376 = sbr.rel (%p374) target = $region48
        $region47: #{tpu_custom_call.1} parent=31 // pred_region
          _
        $region48: #{tpu_custom_call.1} parent=31 // pred_fallthru
          _
      $region32: #{tpu_custom_call.1} parent=5 // pred_fallthru
        _
      %p377 = scmp.le.s32.totalorder 2, %s12
      // Predicated region
      $region49: #{tpu_custom_call.1} parent=5 // pred_check
        %p378 = pneg %p377
      $region50: #{tpu_custom_call.1} parent=5 // pred_check_branch
        %380 = sbr.rel (%p378) target = $region52
      $region51: #{tpu_custom_call.1} parent=5 // pred_region
        %s381 = ssub.s32 %s12, 2
        // Predicated region
        $region53: #{tpu_custom_call.1} parent=51 // pred_check
          %p382 = pneg %p130
        $region54: #{tpu_custom_call.1} parent=51 // pred_check_branch
          %384 = sbr.rel (%p382) target = $region56
        $region55: #{tpu_custom_call.1} parent=51 // pred_region
          %p385 = scmp.lt.s32.totalorder %s23, 1
          %s386 = scalar_select %p385, %s23, 1
          %s387 = scalar_lea.vmem %s3, %s386
        $region56: #{tpu_custom_call.1} parent=51 // pred_fallthru
          _
      $region52: #{tpu_custom_call.1} parent=5 // pred_fallthru
        _
    $region6: #{tpu_custom_call.1} parent=1 // loop_footer
      %s16 = sadd.s32 1, %s12
    $region7: #{tpu_custom_call.1} parent=1 // loop_footer_branch
      %11 = sbr.rel target = $region3
    $region8: #{tpu_custom_call.1} parent=1 // loop_exit
      _
    %388 = vsyncpa [#allocation5], 1
    %s389 = scalar_lea.sflag [#allocation5], 1
    %390 = vsyncpa %s389, 1

</llo_original>
